<compile_context>
chip_gen: v7x
topology: tpu7x:2x2x1
jax: 0.10.0
libtpu: 0.0.40
codegen_flags: <defaults>
</compile_context>

<pallas_src>
import functools

import jax
import jax.numpy as jnp
from jax.experimental import pallas as pl
from jax.experimental.pallas import tpu as pltpu


def _round_up(x, m):
    return ((x + m - 1) // m) * m


def _cdiv(a, b):
    return -(-a // b)


def policy_kernel(x_ref, w1_ref, b1_ref, w2_ref, b2_ref, out_ref):
    """One batch tile: fc1 -> dropout(eval)=identity -> relu -> fc2 -> softmax."""
    # fc1: (TB, S) @ (S, H) + (1, H); dropout in eval mode is identity; relu.
    h = jnp.dot(x_ref[...], w1_ref[...], preferred_element_type=jnp.float32)
    h = jnp.maximum(h + b1_ref[...], 0.0)

    # fc2: (TB, H) @ (H, A) + (1, A)
    logits = jnp.dot(h, w2_ref[...], preferred_element_type=jnp.float32)
    logits = logits + b2_ref[...]

    # Row-wise softmax over the (unpadded) action axis. Exact normalization:
    # approx reciprocal is not bit-accurate enough (and downstream Categorical
    # sampling prefers exact row sums).
    m = jnp.max(logits, axis=-1, keepdims=True)
    e = jnp.exp(logits - m)
    out_ref[...] = e / jnp.sum(e, axis=-1, keepdims=True)


def _choose_tile(batch, block_b):
    """Pick (tile_rows, padded_batch).

    Tiny batches run as a single grid step (minimal fixed per-step overhead);
    larger batches get >= 2 "parallel" steps so v7x's two TensorCores both
    receive work (the extra step is ~0.35us on single-TC v5e/v6e).
    """
    rb = _round_up(batch, 8)  # sublane multiple
    if rb <= 128:
        return rb, rb
    steps = max(2, _cdiv(rb, block_b))
    tb = min(block_b, _round_up(_cdiv(rb, steps), 8))
    return tb, _round_up(rb, tb)


@functools.partial(jax.jit, static_argnames=("block_b",))
def policy_forward(state, w1_t, b1, w2_t, b2, *, block_b=4096):
    """state: (B, S); w1_t: (S, H); b1: (1, H); w2_t: (H, A); b2: (1, A).

    Weights are passed pre-transposed (in, out) relative to PyTorch's
    (out, in) storage, so the kernel computes plain `x @ W + b`.
    Returns softmax probabilities of shape (B, A) in float32.
    """
    B, S = state.shape
    H = w1_t.shape[1]
    A = w2_t.shape[1]

    TB, B_pad = _choose_tile(B, block_b)
    if B_pad != B:
        state = jnp.pad(state, ((0, B_pad - B), (0, 0)))

    grid = (B_pad // TB,)

    out = pl.pallas_call(
        policy_kernel,
        out_shape=jax.ShapeDtypeStruct((B_pad, A), jnp.float32),
        grid=grid,
        in_specs=[
            pl.BlockSpec((TB, S), lambda i: (i, 0)),   # streamed activations
            pl.BlockSpec((S, H), lambda i: (0, 0)),    # VMEM-resident weights
            pl.BlockSpec((1, H), lambda i: (0, 0)),
            pl.BlockSpec((H, A), lambda i: (0, 0)),
            pl.BlockSpec((1, A), lambda i: (0, 0)),
        ],
        out_specs=pl.BlockSpec((TB, A), lambda i: (i, 0)),
        compiler_params=pltpu.CompilerParams(
            dimension_semantics=("parallel",),
        ),
    )(state, w1_t, b1, w2_t, b2)

    if B_pad != B:
        out = out[:B]
    return out


def _reference(state, w1_t, b1, w2_t, b2):
    # Highest-precision f32 matmuls so the XLA reference matches the kernel's
    # f32 MXU math (XLA's default TPU precision would otherwise use bf16).
    hp = jax.lax.Precision.HIGHEST
    h = jnp.maximum(jnp.dot(state, w1_t, precision=hp) + b1, 0.0)
    return jax.nn.softmax(jnp.dot(h, w2_t, precision=hp) + b2, axis=1)


if __name__ == "__main__":
    # Shapes consistent with the module: state_size=8, hidden_size=32, actions=6.
    S, H, A = 8, 32, 6

    key = jax.random.PRNGKey(0)
    k_x, k_xb, k_w1, k_b1, k_w2, k_b2 = jax.random.split(key, 6)

    # Deterministic init mimicking nn.Linear's U(-1/sqrt(fan_in), 1/sqrt(fan_in)).
    lim1 = 1.0 / jnp.sqrt(jnp.float32(S))
    lim2 = 1.0 / jnp.sqrt(jnp.float32(H))
    w1_t = jax.random.uniform(k_w1, (S, H), jnp.float32, -lim1, lim1)
    b1 = jax.random.uniform(k_b1, (1, H), jnp.float32, -lim1, lim1)
    w2_t = jax.random.uniform(k_w2, (H, A), jnp.float32, -lim2, lim2)
    b2 = jax.random.uniform(k_b2, (1, A), jnp.float32, -lim2, lim2)

    # Small case: the latency-critical single-step policy query (grid of 1).
    state_small = jax.random.normal(k_x, (4, S), dtype=jnp.float32)
    probs_small = policy_forward(state_small, w1_t, b1, w2_t, b2)
    jax.block_until_ready(probs_small)

    ref_small = _reference(state_small, w1_t, b1, w2_t, b2)
    assert probs_small.shape == (4, A)
    assert jnp.allclose(probs_small, ref_small, atol=2e-4), "small-batch mismatch"
    assert jnp.allclose(jnp.sum(probs_small, axis=1), 1.0, atol=1e-4)

    # Batched rollout case: exercises the 2-step "parallel" batch grid with
    # VMEM-resident weights.
    state_big = jax.random.normal(k_xb, (1024, S), dtype=jnp.float32)
    probs_big = policy_forward(state_big, w1_t, b1, w2_t, b2)
    jax.block_until_ready(probs_big)

    ref_big = _reference(state_big, w1_t, b1, w2_t, b2)
    assert probs_big.shape == (1024, A)
    assert jnp.allclose(probs_big, ref_big, atol=2e-4), "batched mismatch"
    assert jnp.allclose(jnp.sum(probs_big, axis=1), 1.0, atol=1e-4)

    print("KERNEL_OK")
</pallas_src>

<mosaic_0001>
module attributes {stable_mosaic.version = 11 : i64} {
  func.func @policy_kernel(%arg0: i32, %arg1: memref<8x8xf32, #tpu.memory_space<vmem>>, %arg2: memref<8x32xf32, #tpu.memory_space<vmem>>, %arg3: memref<1x32xf32, #tpu.memory_space<vmem>>, %arg4: memref<32x6xf32, #tpu.memory_space<vmem>>, %arg5: memref<1x6xf32, #tpu.memory_space<vmem>>, %arg6: memref<8x6xf32, #tpu.memory_space<vmem>>) attributes {dimension_semantics = [#tpu.dimension_semantics<parallel>], iteration_bounds = array<i64: 1>, scalar_prefetch = 0 : i64, scratch_operands = 0 : i64, tpu.core_type = #tpu.core_type<tc>, window_params = [{transform_indices = @transform_0, window_bounds = array<i64: 8, 8>}, {pipeline_mode = #tpu.pipeline_mode<synchronous>, transform_indices = @transform_1, window_bounds = array<i64: 8, 32>}, {pipeline_mode = #tpu.pipeline_mode<synchronous>, transform_indices = @transform_2, window_bounds = array<i64: 1, 32>}, {pipeline_mode = #tpu.pipeline_mode<synchronous>, transform_indices = @transform_3, window_bounds = array<i64: 32, 6>}, {pipeline_mode = #tpu.pipeline_mode<synchronous>, transform_indices = @transform_4, window_bounds = array<i64: 1, 6>}, {transform_indices = @transform_5, window_bounds = array<i64: 8, 6>}]} {
    %c0 = arith.constant 0 : index
    %c0_0 = arith.constant 0 : index
    %0 = vector.load %arg1[%c0, %c0_0] : memref<8x8xf32, #tpu.memory_space<vmem>>, vector<8x8xf32>
    %c0_1 = arith.constant 0 : index
    %c0_2 = arith.constant 0 : index
    %1 = vector.load %arg2[%c0_1, %c0_2] : memref<8x32xf32, #tpu.memory_space<vmem>>, vector<8x32xf32>
    %cst = arith.constant dense<0.000000e+00> : vector<8x32xf32>
    %2 = tpu.matmul %0, %1, %cst {dimension_numbers = #tpu.dot_dimension_numbers<[1], [0], [0], [1], [0, 0, 1, 1], [], []>} : vector<8x8xf32>, vector<8x32xf32>, vector<8x32xf32> -> vector<8x32xf32>
    %c0_3 = arith.constant 0 : index
    %c0_4 = arith.constant 0 : index
    %3 = vector.load %arg3[%c0_3, %c0_4] : memref<1x32xf32, #tpu.memory_space<vmem>>, vector<1x32xf32>
    %4 = vector.broadcast %3 : vector<1x32xf32> to vector<8x32xf32>
    %5 = arith.addf %2, %4 : vector<8x32xf32>
    %cst_5 = arith.constant 0.000000e+00 : f32
    %6 = vector.broadcast %cst_5 : f32 to vector<8x32xf32>
    %7 = arith.maximumf %5, %6 : vector<8x32xf32>
    %c0_6 = arith.constant 0 : index
    %c0_7 = arith.constant 0 : index
    %8 = vector.load %arg4[%c0_6, %c0_7] : memref<32x6xf32, #tpu.memory_space<vmem>>, vector<32x6xf32>
    %cst_8 = arith.constant dense<0.000000e+00> : vector<8x6xf32>
    %9 = tpu.matmul %7, %8, %cst_8 {dimension_numbers = #tpu.dot_dimension_numbers<[1], [0], [0], [1], [0, 0, 1, 1], [], []>} : vector<8x32xf32>, vector<32x6xf32>, vector<8x6xf32> -> vector<8x6xf32>
    %c0_9 = arith.constant 0 : index
    %c0_10 = arith.constant 0 : index
    %10 = vector.load %arg5[%c0_9, %c0_10] : memref<1x6xf32, #tpu.memory_space<vmem>>, vector<1x6xf32>
    %11 = vector.broadcast %10 : vector<1x6xf32> to vector<8x6xf32>
    %12 = arith.addf %9, %11 : vector<8x6xf32>
    %cst_11 = arith.constant dense<0xFF800000> : vector<8xf32>
    %13 = vector.multi_reduction <maximumf>, %12, %cst_11 [1] : vector<8x6xf32> to vector<8xf32>
    %14 = vector.shape_cast %13 : vector<8xf32> to vector<8x1xf32>
    %15 = vector.broadcast %14 : vector<8x1xf32> to vector<8x6xf32>
    %16 = arith.subf %12, %15 : vector<8x6xf32>
    %17 = math.exp %16 : vector<8x6xf32>
    %cst_12 = arith.constant dense<0.000000e+00> : vector<8xf32>
    %18 = vector.multi_reduction <add>, %17, %cst_12 [1] : vector<8x6xf32> to vector<8xf32>
    %19 = vector.shape_cast %18 : vector<8xf32> to vector<8x1xf32>
    %20 = vector.broadcast %19 : vector<8x1xf32> to vector<8x6xf32>
    %21 = arith.divf %17, %20 : vector<8x6xf32>
    %c0_13 = arith.constant 0 : index
    %c0_14 = arith.constant 0 : index
    %22 = vector.load %arg6[%c0_13, %c0_14] : memref<8x6xf32, #tpu.memory_space<vmem>>, vector<8x6xf32>
    tpu.vector_store %arg6[%c0_13, %c0_14], %21 {strides = array<i32>} : memref<8x6xf32, #tpu.memory_space<vmem>>, vector<8x6xf32>,
    return
  }
  func.func @transform_0(%arg0: i32) -> (i32, i32) {
    %c0_i32 = arith.constant 0 : i32
    %c0_i32_0 = arith.constant 0 : i32
    return %arg0, %c0_i32 : i32, i32
  }
  func.func @transform_1(%arg0: i32) -> (i32, i32) {
    %c0_i32 = arith.constant 0 : i32
    %c0_i32_0 = arith.constant 0 : i32
    %c0_i32_1 = arith.constant 0 : i32
    return %c0_i32, %c0_i32_0 : i32, i32
  }
  func.func @transform_2(%arg0: i32) -> (i32, i32) {
    %c0_i32 = arith.constant 0 : i32
    %c0_i32_0 = arith.constant 0 : i32
    %c0_i32_1 = arith.constant 0 : i32
    return %c0_i32, %c0_i32_0 : i32, i32
  }
  func.func @transform_3(%arg0: i32) -> (i32, i32) {
    %c0_i32 = arith.constant 0 : i32
    %c0_i32_0 = arith.constant 0 : i32
    %c0_i32_1 = arith.constant 0 : i32
    return %c0_i32, %c0_i32_0 : i32, i32
  }
  func.func @transform_4(%arg0: i32) -> (i32, i32) {
    %c0_i32 = arith.constant 0 : i32
    %c0_i32_0 = arith.constant 0 : i32
    %c0_i32_1 = arith.constant 0 : i32
    return %c0_i32, %c0_i32_0 : i32, i32
  }
  func.func @transform_5(%arg0: i32) -> (i32, i32) {
    %c0_i32 = arith.constant 0 : i32
    %c0_i32_0 = arith.constant 0 : i32
    return %arg0, %c0_i32 : i32, i32
  }
}

</mosaic_0001>

<llo_original>
// kernel: policy_forward.1
$region0: #{policy_forward.1}
  #allocation0 [shape = 'u32[]', space=smem, size = 0x4, offset = 0x4, fixed_abs, tag = 'smem constant byte address 0x4 - core index']
  #allocation1 [shape = 'u32[144,128]{1,0:T(1,128)}', space=vmem, size = 0x12000, scoped, tag = 'internal scratch']
  %s0 = inlined_call_operand.vmem [shape: f32[8,8], index: 0, kind: input, shape index: {}]
  %s1 = inlined_call_operand.vmem [shape: f32[8,32], index: 1, kind: input, shape index: {}]
  %s2 = inlined_call_operand.vmem [shape: f32[1,32], index: 2, kind: input, shape index: {}]
  %s3 = inlined_call_operand.vmem [shape: f32[32,6], index: 3, kind: input, shape index: {}]
  %s4 = inlined_call_operand.vmem [shape: f32[1,6], index: 4, kind: input, shape index: {}]
  %s5 = inlined_call_operand.vmem [shape: f32[8,6], index: 5, kind: output, shape index: {}]
  %s6 = sld [smem:[#allocation0]]
  $region30: #{policy_forward.1} parent=0
    _
  %s8 = ssub.s32 1, %s6
  %s9 = scalar_select 0, %s8, %s6
  // Predicated region
  $region2: #{policy_forward.1} parent=0 // pred_check
    _
  $region3: #{policy_forward.1} parent=0 // pred_check_branch
    %11 = sbr.rel (0) target = $region5
  $region4: #{policy_forward.1} parent=0 // pred_region
    _
  $region5: #{policy_forward.1} parent=0 // pred_fallthru
    _
  // Predicated region
  $region6: #{policy_forward.1} parent=0 // pred_check
    _
  $region7: #{policy_forward.1} parent=0 // pred_check_branch
    %13 = sbr.rel (0) target = $region9
  $region8: #{policy_forward.1} parent=0 // pred_region
    _
  $region9: #{policy_forward.1} parent=0 // pred_fallthru
    _
  // Predicated region
  $region10: #{policy_forward.1} parent=0 // pred_check
    _
  $region11: #{policy_forward.1} parent=0 // pred_check_branch
    %15 = sbr.rel (0) target = $region13
  $region12: #{policy_forward.1} parent=0 // pred_region
    _
  $region13: #{policy_forward.1} parent=0 // pred_fallthru
    _
  // Predicated region
  $region14: #{policy_forward.1} parent=0 // pred_check
    _
  $region15: #{policy_forward.1} parent=0 // pred_check_branch
    %17 = sbr.rel (0) target = $region17
  $region16: #{policy_forward.1} parent=0 // pred_region
    _
  $region17: #{policy_forward.1} parent=0 // pred_fallthru
    _
  // Predicated region
  $region18: #{policy_forward.1} parent=0 // pred_check
    _
  $region19: #{policy_forward.1} parent=0 // pred_check_branch
    %19 = sbr.rel (0) target = $region21
  $region20: #{policy_forward.1} parent=0 // pred_region
    _
  $region21: #{policy_forward.1} parent=0 // pred_fallthru
    _
  %v20 = vld [vmem:[%s0] sm:$0xff]
  %v21 = vld [vmem:[%s1] sm:$0xff]
  %v22 = vld [vmem:[%s2] sm:$0x1]
  %v24 = vlaneseq
  %v25 = vshrl.u32 %v24, 7
  %v26 = vsub.s32 0, %v25
  %v27 = vrot.slane %v22, %v26
  %vm29 = vcmask 64512
  %v31 = vsel %vm29, %v20, 0
  %33 = vmatprep.subr.mxu0 0.0
  %34 = vmatpush1.msra.mxu0 %v21
  %35 = vmatprep.subr.mxu0 0.0
  %36 = vmatpush1.msra.mxu0 0.0
  %37 = vmatprep.subr.mxu0 0.0
  %38 = vmatpush1.msra.mxu0 0.0
  %39 = vmatprep.subr.mxu0 0.0
  %40 = vmatpush1.msra.mxu0 0.0
  %41 = vmatprep.subr.mxu0 0.0
  %42 = vmatpush1.msra.mxu0 0.0
  %43 = vmatprep.subr.mxu0 0.0
  %44 = vmatpush1.msra.mxu0 0.0
  %45 = vmatprep.subr.mxu0 0.0
  %46 = vmatpush1.msra.mxu0 0.0
  %47 = vmatprep.subr.mxu0 0.0
  %48 = vmatpush1.msra.mxu0 0.0
  %49 = vmatprep.subr.mxu0 0.0
  %50 = vmatpush1.msra.mxu0 0.0
  %51 = vmatprep.subr.mxu0 0.0
  %52 = vmatpush1.msra.mxu0 0.0
  %53 = vmatprep.subr.mxu0 0.0
  %54 = vmatpush1.msra.mxu0 0.0
  %55 = vmatprep.subr.mxu0 0.0
  %56 = vmatpush1.msra.mxu0 0.0
  %57 = vmatprep.subr.mxu0 0.0
  %58 = vmatpush1.msra.mxu0 0.0
  %59 = vmatprep.subr.mxu0 0.0
  %60 = vmatpush1.msra.mxu0 0.0
  %61 = vmatprep.subr.mxu0 0.0
  %62 = vmatpush1.msra.mxu0 0.0
  %63 = vmatprep.subr.mxu0 0.0
  %64 = vmatpush1.msra.mxu0 0.0
  %65 = vmatprep.subr.mxu0 0.0
  %66 = vmatpush1.msra.mxu0 0.0
  %67 = vmatprep.subr.mxu0 0.0
  %68 = vmatpush1.msra.mxu0 0.0
  %69 = vmatprep.subr.mxu0 0.0
  %70 = vmatpush1.msra.mxu0 0.0
  %71 = vmatprep.subr.mxu0 0.0
  %72 = vmatpush1.msra.mxu0 0.0
  %73 = vmatprep.subr.mxu0 0.0
  %74 = vmatpush1.msra.mxu0 0.0
  %75 = vmatprep.subr.mxu0 0.0
  %76 = vmatpush1.msra.mxu0 0.0
  %77 = vmatprep.subr.mxu0 0.0
  %78 = vmatpush1.msra.mxu0 0.0
  %79 = vmatprep.subr.mxu0 0.0
  %80 = vmatpush1.msra.mxu0 0.0
  %81 = vmatprep.subr.mxu0 0.0
  %82 = vmatpush1.msra.mxu0 0.0
  %83 = vmatprep.subr.mxu0 0.0
  %84 = vmatpush1.msra.mxu0 0.0
  %85 = vmatprep.subr.mxu0 0.0
  %86 = vmatpush1.msra.mxu0 0.0
  %87 = vmatprep.subr.mxu0 0.0
  %88 = vmatpush1.msra.mxu0 0.0
  %89 = vmatprep.subr.mxu0 0.0
  %90 = vmatpush1.msra.mxu0 0.0
  %91 = vmatprep.subr.mxu0 0.0
  %92 = vmatpush1.msra.mxu0 0.0
  %93 = vmatprep.subr.mxu0 0.0
  %94 = vmatpush1.msra.mxu0 0.0
  %95 = vmatprep.subr.mxu0 0.0
  %96 = vmatpush1.msra.mxu0 0.0
  %97 = vmatprep.mubr.f32.mxu0 0.0
  %98 = vmatmul.mubr.f32.gmra.mrb[0].mxu0 %v31
  %v99 = vpop.f32.mrb[0].mxu0
  %v100 = vadd.f32 %v27, %v99
  %v101 = vpop.f32.mrb[0].mxu0
  %102 = vdwg.mxu0
  %v103 = vmax.f32 %v100, 0.0
  %v104 = vld [vmem:[%s3] sm:$0xff]
  %v105 = vld [vmem:[%s3 + $0x8] sm:$0xff]
  %v106 = vld [vmem:[%s3 + $0x10] sm:$0xff]
  %v107 = vld [vmem:[%s3 + $0x18] sm:$0xff]
  %v108 = vld [vmem:[%s4] sm:$0x1]
  %v110 = vlaneseq
  %v111 = vshrl.u32 %v110, 7
  %v112 = vsub.s32 0, %v111
  %v113 = vrot.slane %v108, %v112
  %vm115 = vcmask 261120
  %v117 = vsel %vm115, %v103, 0
  %119 = vmatprep.subr.mxu0 0.0
  %120 = vmatpush1.msra.mxu0 %v104
  %121 = vmatprep.subr.mxu0 0.0
  %122 = vmatpush1.msra.mxu0 %v105
  %123 = vmatprep.subr.mxu0 0.0
  %124 = vmatpush1.msra.mxu0 %v106
  %125 = vmatprep.subr.mxu0 0.0
  %126 = vmatpush1.msra.mxu0 %v107
  %127 = vmatprep.subr.mxu0 0.0
  %128 = vmatpush1.msra.mxu0 0.0
  %129 = vmatprep.subr.mxu0 0.0
  %130 = vmatpush1.msra.mxu0 0.0
  %131 = vmatprep.subr.mxu0 0.0
  %132 = vmatpush1.msra.mxu0 0.0
  %133 = vmatprep.subr.mxu0 0.0
  %134 = vmatpush1.msra.mxu0 0.0
  %135 = vmatprep.subr.mxu0 0.0
  %136 = vmatpush1.msra.mxu0 0.0
  %137 = vmatprep.subr.mxu0 0.0
  %138 = vmatpush1.msra.mxu0 0.0
  %139 = vmatprep.subr.mxu0 0.0
  %140 = vmatpush1.msra.mxu0 0.0
  %141 = vmatprep.subr.mxu0 0.0
  %142 = vmatpush1.msra.mxu0 0.0
  %143 = vmatprep.subr.mxu0 0.0
  %144 = vmatpush1.msra.mxu0 0.0
  %145 = vmatprep.subr.mxu0 0.0
  %146 = vmatpush1.msra.mxu0 0.0
  %147 = vmatprep.subr.mxu0 0.0
  %148 = vmatpush1.msra.mxu0 0.0
  %149 = vmatprep.subr.mxu0 0.0
  %150 = vmatpush1.msra.mxu0 0.0
  %151 = vmatprep.subr.mxu0 0.0
  %152 = vmatpush1.msra.mxu0 0.0
  %153 = vmatprep.subr.mxu0 0.0
  %154 = vmatpush1.msra.mxu0 0.0
  %155 = vmatprep.subr.mxu0 0.0
  %156 = vmatpush1.msra.mxu0 0.0
  %157 = vmatprep.subr.mxu0 0.0
  %158 = vmatpush1.msra.mxu0 0.0
  %159 = vmatprep.subr.mxu0 0.0
  %160 = vmatpush1.msra.mxu0 0.0
  %161 = vmatprep.subr.mxu0 0.0
  %162 = vmatpush1.msra.mxu0 0.0
  %163 = vmatprep.subr.mxu0 0.0
  %164 = vmatpush1.msra.mxu0 0.0
  %165 = vmatprep.subr.mxu0 0.0
  %166 = vmatpush1.msra.mxu0 0.0
  %167 = vmatprep.subr.mxu0 0.0
  %168 = vmatpush1.msra.mxu0 0.0
  %169 = vmatprep.subr.mxu0 0.0
  %170 = vmatpush1.msra.mxu0 0.0
  %171 = vmatprep.subr.mxu0 0.0
  %172 = vmatpush1.msra.mxu0 0.0
  %173 = vmatprep.subr.mxu0 0.0
  %174 = vmatpush1.msra.mxu0 0.0
  %175 = vmatprep.subr.mxu0 0.0
  %176 = vmatpush1.msra.mxu0 0.0
  %177 = vmatprep.subr.mxu0 0.0
  %178 = vmatpush1.msra.mxu0 0.0
  %179 = vmatprep.subr.mxu0 0.0
  %180 = vmatpush1.msra.mxu0 0.0
  %181 = vmatprep.subr.mxu0 0.0
  %182 = vmatpush1.msra.mxu0 0.0
  %183 = vmatprep.mubr.f32.mxu0 0.0
  %184 = vmatmul.mubr.f32.gmra.mrb[0].mxu0 %v117
  %v185 = vpop.f32.mrb[0].mxu0
  %v186 = vadd.f32 %v113, %v185
  %v187 = vpop.f32.mrb[0].mxu0
  %188 = vdwg.mxu0
  %vm189 = vcmask 48128
  %v190 = vsel %vm189, %v186, -inf
  %191 = vmax.xlane.f32.xlu0 %v190
  %v192 = vpop.xlane.xlu0 %191
  %v193 = vsub.f32 %v186, %v192
  %v194 = vmul.f32 %v193, 1.442695
  %v195 = vpow.pop %v194
  %v196 = vsel %vm189, %v195, 0.0
  %197 = vadd.xlane.f32.xlu0 %v196
  %v198 = vpop.xlane.xlu0 %197
  %v199 = vrcp.pop %v198
  %v200 = vmul.f32 %v195, %v199
  %201 = vst.msk [vmem:[%s5] sm:$0xff] %vm189, %v200
  // Predicated region
  $region22: #{policy_forward.1} parent=0 // pred_check
    _
  $region23: #{policy_forward.1} parent=0 // pred_check_branch
    %203 = sbr.rel (0) target = $region25
  $region24: #{policy_forward.1} parent=0 // pred_region
    _
  $region25: #{policy_forward.1} parent=0 // pred_fallthru
    _
  // Predicated region
  $region26: #{policy_forward.1} parent=0 // pred_check
    _
  $region27: #{policy_forward.1} parent=0 // pred_check_branch
    %205 = sbr.rel (0) target = $region29
  $region28: #{policy_forward.1} parent=0 // pred_region
    _
  $region29: #{policy_forward.1} parent=0 // pred_fallthru
    _

</llo_original>
